<compile_context>
chip_gen: v7x
topology: tpu7x:2x2x1
jax: 0.10.0
libtpu: 0.0.40
codegen_flags: <defaults>
</compile_context>

<pallas_src>
import functools

import jax
import jax.numpy as jnp
from jax.experimental import pallas as pl
from jax.experimental.pallas import tpu as pltpu

ALPHA = 0.5
GAMMA = 2.0        # realized as an explicit square (pm*pm), not jnp.power
BETA = 0.5

LANE = 128
SUBLANE = 8
TM_MAX = 4096      # rows per grid block  -> 2 MiB per f32 input block
CHUNK_ROWS = 256   # rows per in-kernel compute chunk -> ~128 KiB per temporary
NCORES = 2         # leading "parallel" grid axis -> megacore split on v7x
PAD_LOGIT = -1e9   # padding logit; with target==0 it contributes exactly 0


def _cdiv(a, b):
    return -(-a // b)


def _round_up(a, b):
    return _cdiv(a, b) * b


def _combined_loss_kernel(pred_ref, target_ref, o_ref,
                          focal_acc, p_acc, t_acc, pt_acc,
                          *, chunk_rows, num_chunks):
    i = pl.program_id(1)

    @pl.when(i == 0)
    def _():
        focal_acc[...] = jnp.zeros_like(focal_acc)
        p_acc[...] = jnp.zeros_like(p_acc)
        t_acc[...] = jnp.zeros_like(t_acc)
        pt_acc[...] = jnp.zeros_like(pt_acc)

    def fold(v):
        # (chunk_rows, 128) -> (8, 128): sublane-aligned split, so this is pure
        # vreg-wise VPU adds (cross-lane reduction deferred to the epilogue).
        return jnp.sum(v.reshape(-1, SUBLANE, LANE), axis=0)

    # Statically unrolled chunk loop: big DMA block, small compute temporaries.
    for j in range(num_chunks):
        r0 = j * chunk_rows
        x = pred_ref[pl.ds(r0, chunk_rows), :].astype(jnp.float32)
        t = target_ref[pl.ds(r0, chunk_rows), :].astype(jnp.float32)

        # One shared exp:
        #   e   = exp(-|x|)
        #   bce = max(x,0) - x*t + log1p(e)        (stable BCEWithLogits, 'none')
        #   p   = sigmoid(x) = where(x>=0, 1, e) / (1+e)
        e = jnp.exp(-jnp.abs(x))
        bce = jnp.maximum(x, 0.0) - x * t + jnp.log1p(e)
        p = jnp.where(x >= 0.0, 1.0, e) / (1.0 + e)
        pm = 1.0 - p
        focal = (ALPHA * (pm * pm)) * bce          # (1-p)**GAMMA with GAMMA=2

        focal_acc[...] += fold(focal)
        p_acc[...] += fold(p)
        t_acc[...] += fold(t)
        pt_acc[...] += fold(p * t)

    @pl.when(i == pl.num_programs(1) - 1)
    def _():
        o_ref[0, 0, :, :] = focal_acc[...]
        o_ref[0, 1, :, :] = p_acc[...]
        o_ref[0, 2, :, :] = t_acc[...]
        o_ref[0, 3, :, :] = pt_acc[...]


def combined_loss(pred, target):
    """Pallas implementation of CombinedLoss.forward(pred, target, model).

    `model` is unused in the reference forward pass, so it is omitted here.
    Returns a scalar float32.
    """
    assert pred.shape == target.shape
    total = int(pred.size)
    assert total > 0

    # Tiling: split rows across NCORES, then across row-blocks of <= TM_MAX
    # rows (rounded so padding waste is bounded by one CHUNK per core).
    rows = _cdiv(total, LANE)
    rows_per_core = _cdiv(rows, NCORES)
    nblk = max(1, _cdiv(rows_per_core, TM_MAX))
    tm = _round_up(max(_cdiv(rows_per_core, nblk), SUBLANE), SUBLANE)
    if tm > CHUNK_ROWS:
        tm = _round_up(tm, CHUNK_ROWS)
        chunk = CHUNK_ROWS
    else:
        chunk = tm
    nchunk = tm // chunk
    rows_padded = NCORES * nblk * tm
    padded_total = rows_padded * LANE

    # Pad with (logit=-1e9, target=0): bce, focal, sigmoid and all products are
    # exactly 0 there, so padding never perturbs the partial sums (the focal
    # mean divides by the true element count below).  For the common case where
    # the flattened size already tiles evenly this is a zero-copy reshape.
    flat_p = pred.reshape(-1)
    flat_t = target.reshape(-1)
    pad = padded_total - total
    if pad:
        flat_p = jnp.concatenate(
            [flat_p, jnp.full((pad,), PAD_LOGIT, flat_p.dtype)])
        flat_t = jnp.concatenate([flat_t, jnp.zeros((pad,), flat_t.dtype)])
    pred2d = flat_p.reshape(rows_padded, LANE)
    target2d = flat_t.reshape(rows_padded, LANE)

    in_bytes = (pred2d.size * pred2d.dtype.itemsize
                + target2d.size * target2d.dtype.itemsize)
    out_bytes = NCORES * 4 * SUBLANE * LANE * 4
    cost = pl.CostEstimate(
        flops=20 * padded_total,
        transcendentals=3 * padded_total,
        bytes_accessed=in_bytes + out_bytes,
    )

    kernel = functools.partial(
        _combined_loss_kernel, chunk_rows=chunk, num_chunks=nchunk)

    parts = pl.pallas_call(
        kernel,
        out_shape=jax.ShapeDtypeStruct((NCORES, 4, SUBLANE, LANE), jnp.float32),
        grid_spec=pltpu.PrefetchScalarGridSpec(
            num_scalar_prefetch=0,
            grid=(NCORES, nblk),
            in_specs=[
                pl.BlockSpec((tm, LANE), lambda c, i, n=nblk: (c * n + i, 0)),
                pl.BlockSpec((tm, LANE), lambda c, i, n=nblk: (c * n + i, 0)),
            ],
            out_specs=pl.BlockSpec((1, 4, SUBLANE, LANE),
                                   lambda c, i: (c, 0, 0, 0)),
            scratch_shapes=[pltpu.VMEM((SUBLANE, LANE), jnp.float32)
                            for _ in range(4)],
        ),
        compiler_params=pltpu.CompilerParams(
            dimension_semantics=("parallel", "arbitrary"),
            # 2 inputs x 2 pipeline buffers x <=2 MiB + ~1-2 MiB of chunk temps;
            # explicit limit keeps v5e (16 MiB scoped default) from OOM-ing and
            # stays within physical VMEM on v6e/v7x.
            vmem_limit_bytes=32 * 1024 * 1024,
        ),
        cost_estimate=cost,
    )(pred2d, target2d)

    # Tiny epilogue (2*4*8*128 floats) in plain JAX: cross-lane reduce + combine.
    sums = jnp.sum(parts, axis=(0, 2, 3))  # [focal_sum, p_sum, t_sum, (p*t)_sum]
    focal_mean = sums[0] / jnp.float32(total)
    dice_loss = 1.0 - (2.0 * sums[3] + 1.0) / (sums[1] + sums[2] + 1.0)
    return BETA * focal_mean + (1.0 - BETA) * dice_loss


def _reference_loss(pred, target):
    x = pred.astype(jnp.float32)
    t = target.astype(jnp.float32)
    bce = jnp.maximum(x, 0.0) - x * t + jnp.log1p(jnp.exp(-jnp.abs(x)))
    p = jax.nn.sigmoid(x)
    focal = (ALPHA * (1.0 - p) ** GAMMA * bce).mean()
    inter = (p * t).sum()
    dice = 1.0 - (2.0 * inter + 1.0) / (p.sum() + t.sum() + 1.0)
    return BETA * focal + (1.0 - BETA) * dice


if __name__ == "__main__":
    key = jax.random.PRNGKey(0)
    k1, k2, k3, k4 = jax.random.split(key, 4)

    # Shapes consistent with a segmentation head: NCHW logits + binary mask.
    pred = jax.random.normal(k1, (2, 4, 16, 16), dtype=jnp.float32)
    target = (jax.random.uniform(k2, (2, 4, 16, 16)) > 0.5).astype(jnp.float32)
    out = jax.block_until_ready(combined_loss(pred, target))
    ref = _reference_loss(pred, target)
    assert jnp.allclose(out, ref, rtol=1e-4, atol=1e-6), (out, ref)

    # Odd-sized input to exercise the padding / masking path.
    pred2 = jax.random.normal(k3, (3, 1, 17, 23), dtype=jnp.float32)
    target2 = (jax.random.uniform(k4, (3, 1, 17, 23)) > 0.5).astype(jnp.float32)
    out2 = jax.block_until_ready(combined_loss(pred2, target2))
    ref2 = _reference_loss(pred2, target2)
    assert jnp.allclose(out2, ref2, rtol=1e-4, atol=1e-6), (out2, ref2)

    print("KERNEL_OK")
</pallas_src>

<mosaic_0001>
module attributes {stable_mosaic.version = 11 : i64} {
  func.func @_combined_loss_kernel(%arg0: i32, %arg1: i32, %arg2: memref<8x128xf32, #tpu.memory_space<vmem>>, %arg3: memref<8x128xf32, #tpu.memory_space<vmem>>, %arg4: memref<1x4x8x128xf32, #tpu.memory_space<vmem>>, %arg5: memref<8x128xf32, #tpu.memory_space<vmem>>, %arg6: memref<8x128xf32, #tpu.memory_space<vmem>>, %arg7: memref<8x128xf32, #tpu.memory_space<vmem>>, %arg8: memref<8x128xf32, #tpu.memory_space<vmem>>) attributes {dimension_semantics = [#tpu.dimension_semantics<parallel>, #tpu.dimension_semantics<arbitrary>], iteration_bounds = array<i64: 2, 1>, scalar_prefetch = 0 : i64, scratch_operands = 4 : i64, tpu.core_type = #tpu.core_type<tc>, window_params = [{transform_indices = @transform_0, window_bounds = array<i64: 8, 128>}, {transform_indices = @transform_1, window_bounds = array<i64: 8, 128>}, {transform_indices = @transform_2, window_bounds = array<i64: 1, 4, 8, 128>}]} {
    %c0_i32 = arith.constant 0 : i32
    %0 = arith.cmpi eq, %arg1, %c0_i32 : i32
    %1 = arith.extui %0 : i1 to i32
    %c0_i32_0 = arith.constant 0 : i32
    %2 = arith.cmpi ne, %1, %c0_i32_0 : i32
    scf.if %2 {
      %cst_32 = arith.constant 0.000000e+00 : f32
      %52 = vector.broadcast %cst_32 : f32 to vector<8x128xf32>
      %c0_33 = arith.constant 0 : index
      %c0_34 = arith.constant 0 : index
      %53 = vector.load %arg5[%c0_33, %c0_34] : memref<8x128xf32, #tpu.memory_space<vmem>>, vector<8x128xf32>
      tpu.vector_store %arg5[%c0_33, %c0_34], %52 {strides = array<i32>} : memref<8x128xf32, #tpu.memory_space<vmem>>, vector<8x128xf32>,
      %cst_35 = arith.constant 0.000000e+00 : f32
      %54 = vector.broadcast %cst_35 : f32 to vector<8x128xf32>
      %c0_36 = arith.constant 0 : index
      %c0_37 = arith.constant 0 : index
      %55 = vector.load %arg6[%c0_36, %c0_37] : memref<8x128xf32, #tpu.memory_space<vmem>>, vector<8x128xf32>
      tpu.vector_store %arg6[%c0_36, %c0_37], %54 {strides = array<i32>} : memref<8x128xf32, #tpu.memory_space<vmem>>, vector<8x128xf32>,
      %cst_38 = arith.constant 0.000000e+00 : f32
      %56 = vector.broadcast %cst_38 : f32 to vector<8x128xf32>
      %c0_39 = arith.constant 0 : index
      %c0_40 = arith.constant 0 : index
      %57 = vector.load %arg7[%c0_39, %c0_40] : memref<8x128xf32, #tpu.memory_space<vmem>>, vector<8x128xf32>
      tpu.vector_store %arg7[%c0_39, %c0_40], %56 {strides = array<i32>} : memref<8x128xf32, #tpu.memory_space<vmem>>, vector<8x128xf32>,
      %cst_41 = arith.constant 0.000000e+00 : f32
      %58 = vector.broadcast %cst_41 : f32 to vector<8x128xf32>
      %c0_42 = arith.constant 0 : index
      %c0_43 = arith.constant 0 : index
      %59 = vector.load %arg8[%c0_42, %c0_43] : memref<8x128xf32, #tpu.memory_space<vmem>>, vector<8x128xf32>
      tpu.vector_store %arg8[%c0_42, %c0_43], %58 {strides = array<i32>} : memref<8x128xf32, #tpu.memory_space<vmem>>, vector<8x128xf32>,
    } else {
    }
    %c0 = arith.constant 0 : index
    %c0_1 = arith.constant 0 : index
    %3 = vector.load %arg2[%c0, %c0_1] : memref<8x128xf32, #tpu.memory_space<vmem>>, vector<8x128xf32>
    %c0_2 = arith.constant 0 : index
    %c0_3 = arith.constant 0 : index
    %4 = vector.load %arg3[%c0_2, %c0_3] : memref<8x128xf32, #tpu.memory_space<vmem>>, vector<8x128xf32>
    %5 = math.absf %3 : vector<8x128xf32>
    %cst = arith.constant 0.000000e+00 : f32
    %6 = vector.broadcast %cst : f32 to vector<8x128xf32>
    %7 = arith.subf %6, %5 : vector<8x128xf32>
    %8 = math.exp %7 : vector<8x128xf32>
    %cst_4 = arith.constant 0.000000e+00 : f32
    %9 = vector.broadcast %cst_4 : f32 to vector<8x128xf32>
    %10 = arith.maximumf %3, %9 : vector<8x128xf32>
    %11 = arith.mulf %3, %4 : vector<8x128xf32>
    %12 = arith.subf %10, %11 : vector<8x128xf32>
    %13 = math.log1p %8 : vector<8x128xf32>
    %14 = arith.addf %12, %13 : vector<8x128xf32>
    %cst_5 = arith.constant 0.000000e+00 : f32
    %15 = vector.broadcast %cst_5 : f32 to vector<8x128xf32>
    %16 = arith.cmpf oge, %3, %15 : vector<8x128xf32>
    %cst_6 = arith.constant 1.000000e+00 : f32
    %17 = vector.broadcast %cst_6 : f32 to vector<8x128xf32>
    %18 = arith.select %16, %17, %8 : vector<8x128xi1>, vector<8x128xf32>
    %cst_7 = arith.constant 1.000000e+00 : f32
    %19 = vector.broadcast %cst_7 : f32 to vector<8x128xf32>
    %20 = arith.addf %19, %8 : vector<8x128xf32>
    %21 = arith.divf %18, %20 : vector<8x128xf32>
    %cst_8 = arith.constant 1.000000e+00 : f32
    %22 = vector.broadcast %cst_8 : f32 to vector<8x128xf32>
    %23 = arith.subf %22, %21 : vector<8x128xf32>
    %24 = arith.mulf %23, %23 : vector<8x128xf32>
    %cst_9 = arith.constant 5.000000e-01 : f32
    %25 = vector.broadcast %cst_9 : f32 to vector<8x128xf32>
    %26 = arith.mulf %25, %24 : vector<8x128xf32>
    %27 = arith.mulf %26, %14 : vector<8x128xf32>
    %c0_10 = arith.constant 0 : index
    %c0_11 = arith.constant 0 : index
    %28 = vector.load %arg5[%c0_10, %c0_11] : memref<8x128xf32, #tpu.memory_space<vmem>>, vector<8x128xf32>
    %29 = vector.shape_cast %27 : vector<8x128xf32> to vector<1x8x128xf32>
    %cst_12 = arith.constant dense<0.000000e+00> : vector<8x128xf32>
    %30 = vector.multi_reduction <add>, %29, %cst_12 [0] : vector<1x8x128xf32> to vector<8x128xf32>
    %31 = arith.addf %28, %30 : vector<8x128xf32>
    %c0_13 = arith.constant 0 : index
    %c0_14 = arith.constant 0 : index
    %32 = vector.load %arg5[%c0_13, %c0_14] : memref<8x128xf32, #tpu.memory_space<vmem>>, vector<8x128xf32>
    tpu.vector_store %arg5[%c0_13, %c0_14], %31 {strides = array<i32>} : memref<8x128xf32, #tpu.memory_space<vmem>>, vector<8x128xf32>,
    %c0_15 = arith.constant 0 : index
    %c0_16 = arith.constant 0 : index
    %33 = vector.load %arg6[%c0_15, %c0_16] : memref<8x128xf32, #tpu.memory_space<vmem>>, vector<8x128xf32>
    %34 = vector.shape_cast %21 : vector<8x128xf32> to vector<1x8x128xf32>
    %cst_17 = arith.constant dense<0.000000e+00> : vector<8x128xf32>
    %35 = vector.multi_reduction <add>, %34, %cst_17 [0] : vector<1x8x128xf32> to vector<8x128xf32>
    %36 = arith.addf %33, %35 : vector<8x128xf32>
    %c0_18 = arith.constant 0 : index
    %c0_19 = arith.constant 0 : index
    %37 = vector.load %arg6[%c0_18, %c0_19] : memref<8x128xf32, #tpu.memory_space<vmem>>, vector<8x128xf32>
    tpu.vector_store %arg6[%c0_18, %c0_19], %36 {strides = array<i32>} : memref<8x128xf32, #tpu.memory_space<vmem>>, vector<8x128xf32>,
    %c0_20 = arith.constant 0 : index
    %c0_21 = arith.constant 0 : index
    %38 = vector.load %arg7[%c0_20, %c0_21] : memref<8x128xf32, #tpu.memory_space<vmem>>, vector<8x128xf32>
    %39 = vector.shape_cast %4 : vector<8x128xf32> to vector<1x8x128xf32>
    %cst_22 = arith.constant dense<0.000000e+00> : vector<8x128xf32>
    %40 = vector.multi_reduction <add>, %39, %cst_22 [0] : vector<1x8x128xf32> to vector<8x128xf32>
    %41 = arith.addf %38, %40 : vector<8x128xf32>
    %c0_23 = arith.constant 0 : index
    %c0_24 = arith.constant 0 : index
    %42 = vector.load %arg7[%c0_23, %c0_24] : memref<8x128xf32, #tpu.memory_space<vmem>>, vector<8x128xf32>
    tpu.vector_store %arg7[%c0_23, %c0_24], %41 {strides = array<i32>} : memref<8x128xf32, #tpu.memory_space<vmem>>, vector<8x128xf32>,
    %c0_25 = arith.constant 0 : index
    %c0_26 = arith.constant 0 : index
    %43 = vector.load %arg8[%c0_25, %c0_26] : memref<8x128xf32, #tpu.memory_space<vmem>>, vector<8x128xf32>
    %44 = arith.mulf %21, %4 : vector<8x128xf32>
    %45 = vector.shape_cast %44 : vector<8x128xf32> to vector<1x8x128xf32>
    %cst_27 = arith.constant dense<0.000000e+00> : vector<8x128xf32>
    %46 = vector.multi_reduction <add>, %45, %cst_27 [0] : vector<1x8x128xf32> to vector<8x128xf32>
    %47 = arith.addf %43, %46 : vector<8x128xf32>
    %c0_28 = arith.constant 0 : index
    %c0_29 = arith.constant 0 : index
    %48 = vector.load %arg8[%c0_28, %c0_29] : memref<8x128xf32, #tpu.memory_space<vmem>>, vector<8x128xf32>
    tpu.vector_store %arg8[%c0_28, %c0_29], %47 {strides = array<i32>} : memref<8x128xf32, #tpu.memory_space<vmem>>, vector<8x128xf32>,
    %c0_i32_30 = arith.constant 0 : i32
    %49 = arith.cmpi eq, %arg1, %c0_i32_30 : i32
    %50 = arith.extui %49 : i1 to i32
    %c0_i32_31 = arith.constant 0 : i32
    %51 = arith.cmpi ne, %50, %c0_i32_31 : i32
    scf.if %51 {
      %c0_32 = arith.constant 0 : index
      %c0_33 = arith.constant 0 : index
      %52 = vector.load %arg5[%c0_32, %c0_33] : memref<8x128xf32, #tpu.memory_space<vmem>>, vector<8x128xf32>
      %c0_34 = arith.constant 0 : index
      %c0_35 = arith.constant 0 : index
      %c0_36 = arith.constant 0 : index
      %c0_37 = arith.constant 0 : index
      %53 = vector.load %arg4[%c0_34, %c0_35, %c0_36, %c0_37] : memref<1x4x8x128xf32, #tpu.memory_space<vmem>>, vector<1x1x8x128xf32>
      %54 = vector.shape_cast %53 : vector<1x1x8x128xf32> to vector<8x128xf32>
      %55 = vector.shape_cast %52 : vector<8x128xf32> to vector<1x1x8x128xf32>
      tpu.vector_store %arg4[%c0_34, %c0_35, %c0_36, %c0_37], %55 {strides = array<i32>} : memref<1x4x8x128xf32, #tpu.memory_space<vmem>>, vector<1x1x8x128xf32>,
      %c0_38 = arith.constant 0 : index
      %c0_39 = arith.constant 0 : index
      %56 = vector.load %arg6[%c0_38, %c0_39] : memref<8x128xf32, #tpu.memory_space<vmem>>, vector<8x128xf32>
      %c0_40 = arith.constant 0 : index
      %c1 = arith.constant 1 : index
      %c0_41 = arith.constant 0 : index
      %c0_42 = arith.constant 0 : index
      %57 = vector.load %arg4[%c0_40, %c1, %c0_41, %c0_42] : memref<1x4x8x128xf32, #tpu.memory_space<vmem>>, vector<1x1x8x128xf32>
      %58 = vector.shape_cast %57 : vector<1x1x8x128xf32> to vector<8x128xf32>
      %59 = vector.shape_cast %56 : vector<8x128xf32> to vector<1x1x8x128xf32>
      tpu.vector_store %arg4[%c0_40, %c1, %c0_41, %c0_42], %59 {strides = array<i32>} : memref<1x4x8x128xf32, #tpu.memory_space<vmem>>, vector<1x1x8x128xf32>,
      %c0_43 = arith.constant 0 : index
      %c0_44 = arith.constant 0 : index
      %60 = vector.load %arg7[%c0_43, %c0_44] : memref<8x128xf32, #tpu.memory_space<vmem>>, vector<8x128xf32>
      %c0_45 = arith.constant 0 : index
      %c2 = arith.constant 2 : index
      %c0_46 = arith.constant 0 : index
      %c0_47 = arith.constant 0 : index
      %61 = vector.load %arg4[%c0_45, %c2, %c0_46, %c0_47] : memref<1x4x8x128xf32, #tpu.memory_space<vmem>>, vector<1x1x8x128xf32>
      %62 = vector.shape_cast %61 : vector<1x1x8x128xf32> to vector<8x128xf32>
      %63 = vector.shape_cast %60 : vector<8x128xf32> to vector<1x1x8x128xf32>
      tpu.vector_store %arg4[%c0_45, %c2, %c0_46, %c0_47], %63 {strides = array<i32>} : memref<1x4x8x128xf32, #tpu.memory_space<vmem>>, vector<1x1x8x128xf32>,
      %c0_48 = arith.constant 0 : index
      %c0_49 = arith.constant 0 : index
      %64 = vector.load %arg8[%c0_48, %c0_49] : memref<8x128xf32, #tpu.memory_space<vmem>>, vector<8x128xf32>
      %c0_50 = arith.constant 0 : index
      %c3 = arith.constant 3 : index
      %c0_51 = arith.constant 0 : index
      %c0_52 = arith.constant 0 : index
      %65 = vector.load %arg4[%c0_50, %c3, %c0_51, %c0_52] : memref<1x4x8x128xf32, #tpu.memory_space<vmem>>, vector<1x1x8x128xf32>
      %66 = vector.shape_cast %65 : vector<1x1x8x128xf32> to vector<8x128xf32>
      %67 = vector.shape_cast %64 : vector<8x128xf32> to vector<1x1x8x128xf32>
      tpu.vector_store %arg4[%c0_50, %c3, %c0_51, %c0_52], %67 {strides = array<i32>} : memref<1x4x8x128xf32, #tpu.memory_space<vmem>>, vector<1x1x8x128xf32>,
    } else {
    }
    return
  }
  func.func @transform_0(%arg0: i32, %arg1: i32) -> (i32, i32) {
    %c1_i32 = arith.constant 1 : i32
    %0 = arith.muli %arg0, %c1_i32 : i32
    %1 = arith.addi %0, %arg1 : i32
    %c0_i32 = arith.constant 0 : i32
    %c0_i32_0 = arith.constant 0 : i32
    return %1, %c0_i32 : i32, i32
  }
  func.func @transform_1(%arg0: i32, %arg1: i32) -> (i32, i32) {
    %c1_i32 = arith.constant 1 : i32
    %0 = arith.muli %arg0, %c1_i32 : i32
    %1 = arith.addi %0, %arg1 : i32
    %c0_i32 = arith.constant 0 : i32
    %c0_i32_0 = arith.constant 0 : i32
    return %1, %c0_i32 : i32, i32
  }
  func.func @transform_2(%arg0: i32, %arg1: i32) -> (i32, i32, i32, i32) {
    %c0_i32 = arith.constant 0 : i32
    %c0_i32_0 = arith.constant 0 : i32
    %c0_i32_1 = arith.constant 0 : i32
    %c0_i32_2 = arith.constant 0 : i32
    return %arg0, %c0_i32, %c0_i32_0, %c0_i32_1 : i32, i32, i32, i32
  }
}

</mosaic_0001>

<llo_original>
// kernel: tpu_custom_call.1
$region0: #{tpu_custom_call.1}
  #allocation0 [shape = 'u32[]', space=smem, size = 0x4, offset = 0x4, fixed_abs, tag = 'smem constant byte address 0x4 - core index']
  #allocation1 [shape = 'u32[144,128]{1,0:T(1,128)}', space=vmem, size = 0x12000, scoped, tag = 'internal scratch']
  #allocation2 [shape = 'f32[8,128]{1,0:T(8,128)}', space=vmem, size = 0x1000, scoped, tag = 'scratch operand']
  #allocation3 [shape = 'f32[8,128]{1,0:T(8,128)}', space=vmem, size = 0x1000, scoped, tag = 'scratch operand']
  #allocation4 [shape = 'f32[8,128]{1,0:T(8,128)}', space=vmem, size = 0x1000, scoped, tag = 'scratch operand']
  #allocation5 [shape = 'f32[8,128]{1,0:T(8,128)}', space=vmem, size = 0x1000, scoped, tag = 'scratch operand']
  %s0 = inlined_call_operand.hbm [shape: f32[16,128], index: 0, kind: input, shape index: {}]
  %s1 = inlined_call_operand.hbm [shape: f32[16,128], index: 1, kind: input, shape index: {}]
  %s2 = inlined_call_operand.hbm [shape: f32[2,4,8,128], index: 2, kind: output, shape index: {}]
  %s3 = sld [smem:[#allocation0]]
  $region57: #{tpu_custom_call.1} parent=0
    _
  %s5 = ssub.s32 1, %s3
  %s6 = scalar_select 0, %s5, %s3
  $region1: #{tpu_custom_call.1} parent=0
    #allocation6 [shape = 'u8[8192]{0}', space=vmem, size = 0x2000, scoped, tag = 'input window, operand 0']
    #allocation7 [shape = 's32[2]{0}', space=sflag, size = 0x8, scoped, tag = 'scoped memory for tpu_custom_call.1']
    #allocation8 [shape = 's32[2]{0}', space=sflag, size = 0x8, scoped, tag = 'scoped memory for tpu_custom_call.1']
    #allocation9 [shape = 'u8[8192]{0}', space=vmem, size = 0x2000, scoped, tag = 'input window, operand 1']
    #allocation10 [shape = 's32[2]{0}', space=sflag, size = 0x8, scoped, tag = 'scoped memory for tpu_custom_call.1']
    #allocation11 [shape = 'u8[32768]{0}', space=vmem, size = 0x8000, scoped, tag = 'output window, operand 0']
    %7 = vsyncpa [#allocation7], 0
    %s8 = scalar_lea.sflag [#allocation7], 1
    %9 = vsyncpa %s8, 0
    %10 = vsyncpa [#allocation10], 0
    %s11 = scalar_lea.sflag [#allocation10], 1
    %12 = vsyncpa %s11, 0
    %13 = vsyncpa [#allocation8], 0
    %s14 = scalar_lea.sflag [#allocation8], 1
    %15 = vsyncpa %s14, 0
    loop: start=0, step=1, limit=4
    $region2: #{tpu_custom_call.1} parent=1 // loop_pre_header
      _
    $region3: #{tpu_custom_call.1} parent=1 // loop_header
      %s17 = sphi 0, %s21
      %p18 = scmp.ge.s32.totalorder %s17, 4
      %s24 = sphi 0, %s36
      %s25 = sphi 0, %s32
      %s26 = sphi 0, %s24
      %s27 = sphi 0, %s25
      %s28 = sphi 0, %s26
      %s29 = sphi 0, %s27
      %s41 = sphi 0, %s43
      %s44 = sphi 0, %s41
      %s45 = sphi 0, %s44
      %s61 = sphi 0, %s45
      %s69 = sphi 0, %s71
      %s72 = sphi 0, %s69
      %s73 = sphi 0, %s72
      %s89 = sphi 0, %s73
      %s95 = sphi 0, %s97
      %s98 = sphi 0, %s95
      %s99 = sphi 0, %s98
      %s115 = sphi 0, %s99
    $region4: #{tpu_custom_call.1} parent=1 // loop_header_branch
      %20 = sbr.rel (%p18) target = $region8
    $region5: #{tpu_custom_call.1} parent=1 // loop_body
      %s22 = ssub.s32 %s17, 1
      %s23 = ssub.s32 %s17, 2
      %s30 = sadd.s32 1, %s25
      %p31 = scmp.ge.s32.totalorder %s30, 1
      %s32 = scalar_select %p31, 0, %s30
      %s33 = sadd.s32 1, %s24
      %s34 = scalar_select %p31, %s33, %s24
      %p35 = scmp.ge.s32.totalorder %s34, 2
      %s36 = scalar_select %p35, 0, %s34
      %s37 = sadd.s32 %s24, %s25
      %s38 = sadd.s32 %s36, %s32
      %s39 = ssub.s32 %s37, %s38
      %p40 = scmp.eq.s32.totalorder %s39, 0
      %s42 = sadd.s32 %s41, 1
      %s43 = scalar_select %p40, %s41, %s42
      %p46 = pneg %p40
      %p47 = scmp.eq.s32.totalorder %s17, 1
      %p48 = por %p46, %p47
      %p49 = scmp.ne.s32.totalorder %s41, %s44
      %p50 = scmp.eq.s32.totalorder %s17, 0
      %p51 = por %p49, %p50
      %p52 = scmp.ne.s32.totalorder %s41, %s44
      %p53 = scmp.eq.s32.totalorder %s22, 1
      %p54 = por %p52, %p53
      %p55 = scmp.ne.s32.totalorder %s44, %s45
      %p56 = scmp.eq.s32.totalorder %s22, 0
      %p57 = por %p55, %p56
      %p58 = scmp.ne.s32.totalorder %s44, %s45
      %p59 = scmp.eq.s32.totalorder %s23, 1
      %p60 = por %p58, %p59
      %p62 = scmp.ne.s32.totalorder %s45, %s61
      %p63 = scmp.eq.s32.totalorder %s23, 0
      %p64 = por %p62, %p63
      %s65 = sadd.s32 %s24, %s25
      %s66 = sadd.s32 %s36, %s32
      %s67 = ssub.s32 %s65, %s66
      %p68 = scmp.eq.s32.totalorder %s67, 0
      %s70 = sadd.s32 %s69, 1
      %s71 = scalar_select %p68, %s69, %s70
      %p74 = pneg %p68
      %p75 = scmp.eq.s32.totalorder %s17, 1
      %p76 = por %p74, %p75
      %p77 = scmp.ne.s32.totalorder %s69, %s72
      %p78 = scmp.eq.s32.totalorder %s17, 0
      %p79 = por %p77, %p78
      %p80 = scmp.ne.s32.totalorder %s69, %s72
      %p81 = scmp.eq.s32.totalorder %s22, 1
      %p82 = por %p80, %p81
      %p83 = scmp.ne.s32.totalorder %s72, %s73
      %p84 = scmp.eq.s32.totalorder %s22, 0
      %p85 = por %p83, %p84
      %p86 = scmp.ne.s32.totalorder %s72, %s73
      %p87 = scmp.eq.s32.totalorder %s23, 1
      %p88 = por %p86, %p87
      %p90 = scmp.ne.s32.totalorder %s73, %s89
      %p91 = scmp.eq.s32.totalorder %s23, 0
      %p92 = por %p90, %p91
      %s93 = ssub.s32 %s24, %s36
      %p94 = scmp.eq.s32.totalorder %s93, 0
      %s96 = sadd.s32 %s95, 1
      %s97 = scalar_select %p94, %s95, %s96
      %p100 = pneg %p94
      %p101 = scmp.eq.s32.totalorder %s17, 1
      %p102 = por %p100, %p101
      %p103 = scmp.ne.s32.totalorder %s95, %s98
      %p104 = scmp.eq.s32.totalorder %s17, 0
      %p105 = por %p103, %p104
      %p106 = scmp.ne.s32.totalorder %s95, %s98
      %p107 = scmp.eq.s32.totalorder %s22, 1
      %p108 = por %p106, %p107
      %p109 = scmp.ne.s32.totalorder %s98, %s99
      %p110 = scmp.eq.s32.totalorder %s22, 0
      %p111 = por %p109, %p110
      %p112 = scmp.ne.s32.totalorder %s98, %s99
      %p113 = scmp.eq.s32.totalorder %s23, 1
      %p114 = por %p112, %p113
      %p116 = scmp.ne.s32.totalorder %s99, %s115
      %p117 = scmp.eq.s32.totalorder %s23, 0
      %p118 = por %p116, %p117
      %p119 = scmp.le.s32.totalorder 1, %s17
      %p120 = scmp.lt.s32.totalorder %s17, 3
      %p121 = pnand %p119, %p120
      %p122 = pneg %p121
      // Predicated region
      $region9: #{tpu_custom_call.1} parent=5 // pred_check
        _
      $region10: #{tpu_custom_call.1} parent=5 // pred_check_branch
        %124 = sbr.rel (%p121) target = $region12
      $region11: #{tpu_custom_call.1} parent=5 // pred_region
        %s125 = ssub.s32 %s17, 1
      $region12: #{tpu_custom_call.1} parent=5 // pred_fallthru
        _
      %p126 = scmp.lt.s32.totalorder %s17, 2
      // Predicated region
      $region13: #{tpu_custom_call.1} parent=5 // pred_check
        %p127 = pneg %p126
      $region14: #{tpu_custom_call.1} parent=5 // pred_check_branch
        %129 = sbr.rel (%p127) target = $region16
      $region15: #{tpu_custom_call.1} parent=5 // pred_region
        // Predicated region
        $region17: #{tpu_custom_call.1} parent=15 // pred_check
          %p130 = pneg %p51
        $region18: #{tpu_custom_call.1} parent=15 // pred_check_branch
          %132 = sbr.rel (%p130) target = $region20
        $region19: #{tpu_custom_call.1} parent=15 // pred_region
          %s133 = sand.u32 %s41, 1
          %s134 = scalar_lea.sflag [#allocation7], %s133
          %s135 = sand.u32 %s41, 1
          %s136 = smul.addr %s135, 8
          %s137 = scalar_lea.vmem [#allocation6], %s136
          %s138 = sadd.s32 %s24, %s25
          %s140 = ssub.s32 128, 128
          %141 = vsyncadd %s134, %s140
          %s142 = smul.addr %s138, 128
          %s143 = scalar_lea.hbm %s0, %s142
          %s145 = sshll.u32 %s137, 4
          %s146 = int_to_ptr.vmem [resolvable:$true] %s145
          %148 = dma.hbm_to_vmem [thread:$0]  %s143, 128, %s146, %s134
        $region20: #{tpu_custom_call.1} parent=15 // pred_fallthru
          _
        // Predicated region
        $region21: #{tpu_custom_call.1} parent=15 // pred_check
          %p149 = pneg %p79
        $region22: #{tpu_custom_call.1} parent=15 // pred_check_branch
          %151 = sbr.rel (%p149) target = $region24
        $region23: #{tpu_custom_call.1} parent=15 // pred_region
          %s152 = sand.u32 %s69, 1
          %s153 = scalar_lea.sflag [#allocation10], %s152
          %s154 = sand.u32 %s69, 1
          %s155 = smul.addr %s154, 8
          %s156 = scalar_lea.vmem [#allocation9], %s155
          %s157 = sadd.s32 %s24, %s25
          %s159 = ssub.s32 128, 128
          %160 = vsyncadd %s153, %s159
          %s161 = smul.addr %s157, 128
          %s162 = scalar_lea.hbm %s1, %s161
          %s164 = sshll.u32 %s156, 4
          %s165 = int_to_ptr.vmem [resolvable:$true] %s164
          %167 = dma.hbm_to_vmem [thread:$0]  %s162, 128, %s165, %s153
        $region24: #{tpu_custom_call.1} parent=15 // pred_fallthru
          _
      $region16: #{tpu_custom_call.1} parent=5 // pred_fallthru
        _
      %p168 = scmp.le.s32.totalorder 1, %s17
      %p169 = scmp.lt.s32.totalorder %s17, 3
      %p170 = pnand %p168, %p169
      %p171 = pneg %p170
      // Predicated region
      $region25: #{tpu_custom_call.1} parent=5 // pred_check
        _
      $region26: #{tpu_custom_call.1} parent=5 // pred_check_branch
        %173 = sbr.rel (%p170) target = $region28
      $region27: #{tpu_custom_call.1} parent=5 // pred_region
        %s174 = ssub.s32 %s17, 1
        %s175 = sand.u32 %s44, 1
        %s176 = scalar_lea.sflag [#allocation7], %s175
        %s177 = sand.u32 %s44, 1
        %s178 = smul.addr %s177, 8
        %s179 = scalar_lea.vmem [#allocation6], %s178
        // Predicated region
        $region29: #{tpu_custom_call.1} parent=27 // pred_check
          %p180 = pneg %p57
        $region30: #{tpu_custom_call.1} parent=27 // pred_check_branch
          %182 = sbr.rel (%p180) target = $region32
        $region31: #{tpu_custom_call.1} parent=27 // pred_region
          %183 = dma.done %s176, 128
        $region32: #{tpu_custom_call.1} parent=27 // pred_fallthru
          _
        %s184 = sand.u32 %s72, 1
        %s185 = scalar_lea.sflag [#allocation10], %s184
        %s186 = sand.u32 %s72, 1
        %s187 = smul.addr %s186, 8
        %s188 = scalar_lea.vmem [#allocation9], %s187
        // Predicated region
        $region33: #{tpu_custom_call.1} parent=27 // pred_check
          %p189 = pneg %p85
        $region34: #{tpu_custom_call.1} parent=27 // pred_check_branch
          %191 = sbr.rel (%p189) target = $region36
        $region35: #{tpu_custom_call.1} parent=27 // pred_region
          %192 = dma.done %s185, 128
        $region36: #{tpu_custom_call.1} parent=27 // pred_fallthru
          _
        %s193 = sand.u32 %s44, 1
        %s194 = scalar_lea.sflag [#allocation7], %s193
        %s195 = sand.u32 %s44, 1
        %s196 = smul.addr %s195, 8
        %s197 = scalar_lea.vmem [#allocation6], %s196
        %p198 = pneg %p57
        %p199 = pneg %p54
        %s200 = sand.u32 %s72, 1
        %s201 = scalar_lea.sflag [#allocation10], %s200
        %s202 = sand.u32 %s72, 1
        %s203 = smul.addr %s202, 8
        %s204 = scalar_lea.vmem [#allocation9], %s203
        %p205 = pneg %p85
        %p206 = pneg %p82
        %p207 = pneg %p111
        %p208 = pneg %p108
        %s209 = sand.u32 %s98, 1
        %s210 = scalar_lea.sflag [#allocation8], %s209
        %s211 = sand.u32 %s98, 1
        %s212 = smul.addr %s211, 32
        %s213 = scalar_lea.vmem [#allocation11], %s212
        %s214 = sadd.s32 %s26, %s27
        %s215 = sadd.s32 %s26, %s27
        %p216 = scmp.eq.s32.totalorder %s27, 0
        // Predicated region
        $region37: #{tpu_custom_call.1} parent=27 // pred_check
          %p217 = pneg %p216
        $region38: #{tpu_custom_call.1} parent=27 // pred_check_branch
          %219 = sbr.rel (%p217) target = $region40
        $region39: #{tpu_custom_call.1} parent=27 // pred_region
          %220 = vst [vmem:[#allocation2] sm:$0xff] 0.0
          %221 = vst [vmem:[#allocation3] sm:$0xff] 0.0
          %222 = vst [vmem:[#allocation4] sm:$0xff] 0.0
          %223 = vst [vmem:[#allocation5] sm:$0xff] 0.0
        $region40: #{tpu_custom_call.1} parent=27 // pred_fallthru
          _
        %v224 = vld [vmem:[%s179] sm:$0xff]
        %v225 = vld [vmem:[%s188] sm:$0xff]
        %v226 = vand.u32 2147483647, %v224
        %v227 = vsub.f32 0.0, %v226
        %v228 = vmul.f32 %v227, 1.442695
        %v229 = vpow.pop %v228
        %v230 = vmax.f32 %v224, 0.0
        %v231 = vmul.f32 %v224, %v225
        %v232 = vsub.f32 %v230, %v231
        %v233 = vadd.f32 %v229, 1.0
        %v234 = vlog2.pop %v233
        %v235 = vmul.f32 %v234, 0.6931472
        %v236 = vmul.f32 -0.5, %v229
        %v237 = vadd.f32 %v236, 1.0
        %v238 = vmul.f32 %v237, %v229
        %v239 = vand.u32 2147483647, %v229
        %vm240 = vcmp.lt.f32.partialorder %v239, 0.0004427343
        %v241 = vsel %vm240, %v238, %v235
        %v242 = vadd.f32 %v232, %v241
        %vm243 = vcmp.ge.f32.partialorder %v224, 0.0
        %v244 = vsel %vm243, 1.0, %v229
        %v245 = vadd.f32 %v229, 1.0
        %v246 = vrcp.pop %v245
        %v247 = vmul.f32 %v244, %v246
        %v248 = vsub.f32 1.0, %v247
        %v249 = vmul.f32 %v248, %v248
        %v250 = vmul.f32 %v249, 0.5
        %v251 = vmul.f32 %v250, %v242
        %v252 = vld [vmem:[#allocation2] sm:$0xff]
        %v253 = vadd.f32 %v251, 0.0
        %v254 = vadd.f32 %v252, %v253
        %255 = vst [vmem:[#allocation2] sm:$0xff] %v254
        %v256 = vld [vmem:[#allocation3] sm:$0xff]
        %v257 = vadd.f32 %v247, 0.0
        %v258 = vadd.f32 %v256, %v257
        %259 = vst [vmem:[#allocation3] sm:$0xff] %v258
        %v260 = vld [vmem:[#allocation4] sm:$0xff]
        %v261 = vadd.f32 %v225, 0.0
        %v262 = vadd.f32 %v260, %v261
        %263 = vst [vmem:[#allocation4] sm:$0xff] %v262
        %v264 = vld [vmem:[#allocation5] sm:$0xff]
        %v265 = vmul.f32 %v247, %v225
        %v266 = vadd.f32 %v265, 0.0
        %v267 = vadd.f32 %v264, %v266
        %268 = vst [vmem:[#allocation5] sm:$0xff] %v267
        // Predicated region
        $region41: #{tpu_custom_call.1} parent=27 // pred_check
          %p269 = pneg %p216
        $region42: #{tpu_custom_call.1} parent=27 // pred_check_branch
          %271 = sbr.rel (%p269) target = $region44
        $region43: #{tpu_custom_call.1} parent=27 // pred_region
          %v272 = vld [vmem:[#allocation2] sm:$0xff]
          %273 = vst [vmem:[%s213] sm:$0xff] %v272
          %v274 = vld [vmem:[#allocation3] sm:$0xff]
          %s275 = scalar_lea.vmem %s213, 8 [#allocation11]
          %276 = vst [vmem:[%s275] sm:$0xff] %v274
          %v277 = vld [vmem:[#allocation4] sm:$0xff]
          %s278 = scalar_lea.vmem %s213, 16 [#allocation11]
          %279 = vst [vmem:[%s278] sm:$0xff] %v277
          %v280 = vld [vmem:[#allocation5] sm:$0xff]
          %s281 = scalar_lea.vmem %s213, 24 [#allocation11]
          %282 = vst [vmem:[%s281] sm:$0xff] %v280
        $region44: #{tpu_custom_call.1} parent=27 // pred_fallthru
          _
        %s283 = sand.u32 %s98, 1
        %s284 = scalar_lea.sflag [#allocation8], %s283
        %s285 = sand.u32 %s98, 1
        %s286 = smul.addr %s285, 32
        %s287 = scalar_lea.vmem [#allocation11], %s286
        // Predicated region
        $region45: #{tpu_custom_call.1} parent=27 // pred_check
          %p288 = pneg %p108
        $region46: #{tpu_custom_call.1} parent=27 // pred_check_branch
          %290 = sbr.rel (%p288) target = $region48
        $region47: #{tpu_custom_call.1} parent=27 // pred_region
          %s292 = ssub.s32 512, 512
          %293 = vsyncadd %s284, %s292
          %s294 = smul.addr %s26, 4
          %s295 = smul.addr %s294, 128
          %s296 = scalar_lea.hbm %s2, %s295
          %s297 = sshll.u32 %s287, 4
          %s298 = int_to_ptr.vmem [resolvable:$true] %s297
          %303 = dma.vmem_to_hbm [thread:$0]  %s298, 512, %s296, %s284, 128, 128, 8
        $region48: #{tpu_custom_call.1} parent=27 // pred_fallthru
          _
      $region28: #{tpu_custom_call.1} parent=5 // pred_fallthru
        _
      %p304 = scmp.le.s32.totalorder 2, %s17
      // Predicated region
      $region49: #{tpu_custom_call.1} parent=5 // pred_check
        %p305 = pneg %p304
      $region50: #{tpu_custom_call.1} parent=5 // pred_check_branch
        %307 = sbr.rel (%p305) target = $region52
      $region51: #{tpu_custom_call.1} parent=5 // pred_region
        %s308 = ssub.s32 %s17, 2
        // Predicated region
        $region53: #{tpu_custom_call.1} parent=51 // pred_check
          %p309 = pneg %p114
        $region54: #{tpu_custom_call.1} parent=51 // pred_check_branch
          %311 = sbr.rel (%p309) target = $region56
        $region55: #{tpu_custom_call.1} parent=51 // pred_region
          %s312 = sand.u32 %s99, 1
          %s313 = scalar_lea.sflag [#allocation8], %s312
          %s314 = sand.u32 %s99, 1
          %s315 = smul.addr %s314, 32
          %s316 = scalar_lea.vmem [#allocation11], %s315
          %317 = dma.done %s313, 512
        $region56: #{tpu_custom_call.1} parent=51 // pred_fallthru
          _
      $region52: #{tpu_custom_call.1} parent=5 // pred_fallthru
        _
    $region6: #{tpu_custom_call.1} parent=1 // loop_footer
      %s21 = sadd.s32 1, %s17
    $region7: #{tpu_custom_call.1} parent=1 // loop_footer_branch
      %16 = sbr.rel target = $region3
    $region8: #{tpu_custom_call.1} parent=1 // loop_exit
      _
    %318 = vsyncpa [#allocation7], 1
    %s319 = scalar_lea.sflag [#allocation7], 1
    %320 = vsyncpa %s319, 1
    %321 = vsyncpa [#allocation10], 1
    %s322 = scalar_lea.sflag [#allocation10], 1
    %323 = vsyncpa %s322, 1
    %324 = vsyncpa [#allocation8], 1
    %s325 = scalar_lea.sflag [#allocation8], 1
    %326 = vsyncpa %s325, 1

</llo_original>
